<compile_context>
chip_gen: v6e
topology: v6e:2x2x1
jax: 0.10.0
libtpu: 0.0.40
codegen_flags: <defaults>
</compile_context>

<pallas_src>
import functools

import numpy as np
import jax
import jax.numpy as jnp
from jax.experimental import pallas as pl
from jax.experimental.pallas import tpu as pltpu


# ----------------------------------------------------------------------------
# Haar ConvTranspose2d weights (exact +-0.5)
# ----------------------------------------------------------------------------
_COEF = {
    "LL": ((0.5, 0.5), (0.5, 0.5)),
    "LH": ((-0.5, 0.5), (-0.5, 0.5)),
    "HL": ((-0.5, -0.5), (0.5, 0.5)),
}
_BANDS = ("LL", "LH", "HL")


# ----------------------------------------------------------------------------
# Constant expansion matrices (built once per (w, k / wc, dtype), cached)
# ----------------------------------------------------------------------------
@functools.lru_cache(maxsize=None)
def _fold_mats(w, k, dtype_name):
    """(3, k*w, 4*k*w): row s*w + wi  ->  col s*4w + i*2w + 2*wi + j."""
    fw = k * w
    m = np.zeros((3, fw, 4 * fw), np.float32)
    for b, name in enumerate(_BANDS):
        coef = _COEF[name]
        for s in range(k):
            for wi in range(w):
                for i in range(2):
                    for j in range(2):
                        m[b, s * w + wi, s * 4 * w + i * 2 * w + 2 * wi + j] = coef[i][j]
    return jnp.asarray(m, jnp.dtype(dtype_name))


@functools.lru_cache(maxsize=None)
def _chunk_mats(wc, dtype_name):
    """(3, 2, wc, 2*wc): row wi -> col 2*wi + j, one matrix per output-row parity i."""
    m = np.zeros((3, 2, wc, 2 * wc), np.float32)
    for b, name in enumerate(_BANDS):
        coef = _COEF[name]
        for wi in range(wc):
            for i in range(2):
                for j in range(2):
                    m[b, i, wi, 2 * wi + j] = coef[i][j]
    return jnp.asarray(m, jnp.dtype(dtype_name))


# ----------------------------------------------------------------------------
# Kernels
# ----------------------------------------------------------------------------
def _single_block_kernel(ll_ref, lh_ref, hl_ref, m_ref, out_ref):
    """Whole (possibly h-folded) row in one contraction; one lane-dense store."""
    cdt = m_ref.dtype
    out = jnp.dot(ll_ref[...].astype(cdt), m_ref[0], preferred_element_type=jnp.float32)
    out += jnp.dot(lh_ref[...].astype(cdt), m_ref[1], preferred_element_type=jnp.float32)
    out += jnp.dot(hl_ref[...].astype(cdt), m_ref[2], preferred_element_type=jnp.float32)
    out_ref[...] = out.astype(out_ref.dtype)


def _make_chunked_kernel(w, wc):
    """W > 128: static loop over wc-wide chunks; keeps the matmul tiny and the
    constant matrices small while every store window stays contiguous."""
    n_chunks = w // wc

    def kernel(ll_ref, lh_ref, hl_ref, m_ref, out_ref):
        cdt = m_ref.dtype
        for c in range(n_chunks):
            lo = c * wc
            ll = ll_ref[:, lo:lo + wc].astype(cdt)
            lh = lh_ref[:, lo:lo + wc].astype(cdt)
            hl = hl_ref[:, lo:lo + wc].astype(cdt)
            for i in range(2):
                r = jnp.dot(ll, m_ref[0, i], preferred_element_type=jnp.float32)
                r += jnp.dot(lh, m_ref[1, i], preferred_element_type=jnp.float32)
                r += jnp.dot(hl, m_ref[2, i], preferred_element_type=jnp.float32)
                off = i * 2 * w + 2 * lo
                out_ref[:, off:off + 2 * wc] = r.astype(out_ref.dtype)

    return kernel


# ----------------------------------------------------------------------------
# Tiling helpers
# ----------------------------------------------------------------------------
def _round_up8(x):
    return ((int(x) + 7) // 8) * 8


def _fold_factor(h, w):
    """Smallest divisor k of h such that the output row (4*k*w lanes) is >= 128."""
    if 4 * w >= 128:
        return 1
    for k in range(1, h + 1):
        if h % k == 0 and 4 * k * w >= 128:
            return k
    return h


def _chunk_width(w):
    """Largest divisor of w that keeps the per-chunk matmul cheap (<=64 lanes,
    falling back to <=128, then w itself)."""
    for cap_ in (64, 128):
        for d in range(min(w, cap_), 7, -1):
            if w % d == 0:
                return d
    return w


def _pick_tile(rows, width, itemsize, mat_bytes, scratch_row_bytes):
    """Row tile + explicit scoped-VMEM limit, accounting for in-kernel temps."""
    try:
        cap = int(pltpu.get_tpu_info().vmem_capacity_bytes)
    except Exception:
        cap = 64 << 20  # conservative (v7x per-TensorCore VMEM)
    budget = min(cap // 2, 48 << 20)

    if rows >= 16:
        # Keep >= 2 (ideally >= 4) grid steps: megacore split on v7x + overlap.
        div = 4 if rows >= 64 else 2
        tm = min(1024, max(8, _round_up8(pl.cdiv(rows, div))))
    else:
        tm = rows  # full extent -> always a legal block

    def est(t):
        io = 2 * t * (3 * width + 4 * width) * itemsize      # double-buffered I/O
        return io + 2 * mat_bytes + t * scratch_row_bytes + (2 << 20)

    while tm > 8 and est(tm) > budget:
        tm = max(8, _round_up8(tm // 2))

    vmem_limit = int(min(cap - (4 << 20), max(2 * est(tm), 32 << 20)))
    return tm, vmem_limit


# ----------------------------------------------------------------------------
# Wrapper
# ----------------------------------------------------------------------------
def wave_unpool(LL, LH, HL, HH=None, cat=None):
    """Pallas equivalent of WaveUnpool.forward (NCHW inputs).

    HH is accepted for signature parity with the PyTorch module but the
    reference forward (cat=None branch) ignores it, so it is never DMA'd.
    """
    if cat is not None:
        # TODO(synk): the reference forward has no code for cat != None (it
        # falls through and returns None); mirror that rather than guessing.
        return None

    n, c, h, w = LL.shape
    assert LH.shape == LL.shape and HL.shape == LL.shape
    dtype = LL.dtype
    itemsize = jnp.dtype(dtype).itemsize
    mat_dtype = jnp.bfloat16 if dtype == jnp.bfloat16 else jnp.float32
    mat_name = jnp.dtype(mat_dtype).name

    if w <= 128:
        # Single-matmul path (covers small W via h-row folding onto lanes).
        k = _fold_factor(h, w)
        rows, width = (n * c * h) // k, k * w
        mats = _fold_mats(w, k, mat_name)
        kernel = _single_block_kernel
        scratch_row_bytes = 4 * (3 * width + 4 * (4 * width))
    else:
        # Chunked path: W on lanes, wc-wide sub-chunks (wc | w, wc <= 128).
        wc = _chunk_width(w)
        rows, width = n * c * h, w
        mats = _chunk_mats(wc, mat_name)
        kernel = _make_chunked_kernel(w, wc)
        scratch_row_bytes = 4 * (3 * width + 8 * (2 * wc))

    ll2 = LL.reshape(rows, width)
    lh2 = LH.reshape(rows, width)
    hl2 = HL.reshape(rows, width)

    mat_bytes = int(mats.size) * mats.dtype.itemsize
    tm, vmem_limit = _pick_tile(rows, width, itemsize, mat_bytes, scratch_row_bytes)
    grid = (pl.cdiv(rows, tm),)

    band_spec = pl.BlockSpec((tm, width), lambda i: (i, 0))
    mat_spec = pl.BlockSpec(tuple(mats.shape), lambda i: (0,) * mats.ndim)

    out2 = pl.pallas_call(
        kernel,
        out_shape=jax.ShapeDtypeStruct((rows, 4 * width), dtype),
        grid=grid,
        in_specs=[band_spec, band_spec, band_spec, mat_spec],
        out_specs=pl.BlockSpec((tm, 4 * width), lambda i: (i, 0)),
        compiler_params=pltpu.CompilerParams(
            dimension_semantics=("parallel",),   # shard row grid over v7x's 2 TCs
            vmem_limit_bytes=vmem_limit,
        ),
    )(ll2, lh2, hl2, mats)

    # (rows, 4*width) == (N, C, H/k, k, 2, 2W) row-major -> metadata-only reshape.
    return out2.reshape(n, c, 2 * h, 2 * w)


class WaveUnpool:
    """Thin stateless wrapper for parity with the PyTorch module."""

    def __init__(self, in_channels=3):
        self.in_channels = in_channels

    def __call__(self, LL, LH, HL, HH=None, cat=None):
        return wave_unpool(LL, LH, HL, HH, cat)


# ----------------------------------------------------------------------------
# Pure-JAX reference (depthwise ConvTranspose2d, k=2, s=2; HH ignored)
# ----------------------------------------------------------------------------
def _reference_wave_unpool(LL, LH, HL):
    def up(x, coef):
        nb, cb, hb, wb = x.shape
        kmat = jnp.asarray(coef, jnp.float32)
        o = x.astype(jnp.float32)[:, :, :, None, :, None] * kmat[None, None, None, :, None, :]
        return o.reshape(nb, cb, 2 * hb, 2 * wb)

    return up(LL, _COEF["LL"]) + up(LH, _COEF["LH"]) + up(HL, _COEF["HL"])


# ----------------------------------------------------------------------------
# Self-test
# ----------------------------------------------------------------------------
if __name__ == "__main__":
    def _check(shape, key):
        keys = jax.random.split(key, 4)

        # bf16-representable f32 values keep the check tight independent of the
        # MXU's default f32 matmul precision (the +-0.5 weights are bf16-exact).
        def mk(k_):
            x = jax.random.normal(k_, shape, jnp.float32)
            return x.astype(jnp.bfloat16).astype(jnp.float32)

        LL, LH, HL, HH = (mk(k_) for k_ in keys)
        out = jax.jit(wave_unpool)(LL, LH, HL, HH)
        out = jax.block_until_ready(out)

        nb, cb, hb, wb = shape
        assert out.shape == (nb, cb, 2 * hb, 2 * wb), out.shape
        ref = _reference_wave_unpool(LL, LH, HL)
        err = float(jnp.max(jnp.abs(out.astype(jnp.float32) - ref)))
        assert err < 1e-5, f"max abs error {err} for shape {shape}"

    root = jax.random.PRNGKey(0)
    k0, k1, k2 = jax.random.split(root, 3)
    _check((2, 4, 16, 16), k0)   # small-W path: h-fold (k=2), single matmul, lane-dense out
    _check((1, 2, 8, 64), k1)    # mid-W path:   k=1, single matmul
    _check((1, 1, 8, 256), k2)   # large-W path: chunked matmul (wc=64)
    print("KERNEL_OK")
</pallas_src>

<mosaic_0001>
module attributes {stable_mosaic.version = 11 : i64} {
  func.func @_single_block_kernel(%arg0: i32, %arg1: memref<16x32xf32, #tpu.memory_space<vmem>>, %arg2: memref<16x32xf32, #tpu.memory_space<vmem>>, %arg3: memref<16x32xf32, #tpu.memory_space<vmem>>, %arg4: memref<3x32x128xf32, #tpu.memory_space<vmem>>, %arg5: memref<16x128xf32, #tpu.memory_space<vmem>>) attributes {dimension_semantics = [#tpu.dimension_semantics<parallel>], iteration_bounds = array<i64: 4>, scalar_prefetch = 0 : i64, scratch_operands = 0 : i64, tpu.core_type = #tpu.core_type<tc>, window_params = [{transform_indices = @transform_0, window_bounds = array<i64: 16, 32>}, {transform_indices = @transform_1, window_bounds = array<i64: 16, 32>}, {transform_indices = @transform_2, window_bounds = array<i64: 16, 32>}, {pipeline_mode = #tpu.pipeline_mode<synchronous>, transform_indices = @transform_3, window_bounds = array<i64: 3, 32, 128>}, {transform_indices = @transform_4, window_bounds = array<i64: 16, 128>}]} {
    %c0 = arith.constant 0 : index
    %c0_0 = arith.constant 0 : index
    %0 = vector.load %arg1[%c0, %c0_0] : memref<16x32xf32, #tpu.memory_space<vmem>>, vector<16x32xf32>
    %c0_1 = arith.constant 0 : index
    %c0_2 = arith.constant 0 : index
    %c0_3 = arith.constant 0 : index
    %1 = vector.load %arg4[%c0_1, %c0_2, %c0_3] : memref<3x32x128xf32, #tpu.memory_space<vmem>>, vector<1x32x128xf32>
    %2 = vector.shape_cast %1 : vector<1x32x128xf32> to vector<32x128xf32>
    %cst = arith.constant dense<0.000000e+00> : vector<16x128xf32>
    %3 = tpu.matmul %0, %2, %cst {dimension_numbers = #tpu.dot_dimension_numbers<[1], [0], [0], [1], [0, 0, 1, 1], [], []>} : vector<16x32xf32>, vector<32x128xf32>, vector<16x128xf32> -> vector<16x128xf32>
    %c0_4 = arith.constant 0 : index
    %c0_5 = arith.constant 0 : index
    %4 = vector.load %arg2[%c0_4, %c0_5] : memref<16x32xf32, #tpu.memory_space<vmem>>, vector<16x32xf32>
    %c1 = arith.constant 1 : index
    %c0_6 = arith.constant 0 : index
    %c0_7 = arith.constant 0 : index
    %5 = vector.load %arg4[%c1, %c0_6, %c0_7] : memref<3x32x128xf32, #tpu.memory_space<vmem>>, vector<1x32x128xf32>
    %6 = vector.shape_cast %5 : vector<1x32x128xf32> to vector<32x128xf32>
    %cst_8 = arith.constant dense<0.000000e+00> : vector<16x128xf32>
    %7 = tpu.matmul %4, %6, %cst_8 {dimension_numbers = #tpu.dot_dimension_numbers<[1], [0], [0], [1], [0, 0, 1, 1], [], []>} : vector<16x32xf32>, vector<32x128xf32>, vector<16x128xf32> -> vector<16x128xf32>
    %8 = arith.addf %3, %7 : vector<16x128xf32>
    %c0_9 = arith.constant 0 : index
    %c0_10 = arith.constant 0 : index
    %9 = vector.load %arg3[%c0_9, %c0_10] : memref<16x32xf32, #tpu.memory_space<vmem>>, vector<16x32xf32>
    %c2 = arith.constant 2 : index
    %c0_11 = arith.constant 0 : index
    %c0_12 = arith.constant 0 : index
    %10 = vector.load %arg4[%c2, %c0_11, %c0_12] : memref<3x32x128xf32, #tpu.memory_space<vmem>>, vector<1x32x128xf32>
    %11 = vector.shape_cast %10 : vector<1x32x128xf32> to vector<32x128xf32>
    %cst_13 = arith.constant dense<0.000000e+00> : vector<16x128xf32>
    %12 = tpu.matmul %9, %11, %cst_13 {dimension_numbers = #tpu.dot_dimension_numbers<[1], [0], [0], [1], [0, 0, 1, 1], [], []>} : vector<16x32xf32>, vector<32x128xf32>, vector<16x128xf32> -> vector<16x128xf32>
    %13 = arith.addf %8, %12 : vector<16x128xf32>
    %c0_14 = arith.constant 0 : index
    %c0_15 = arith.constant 0 : index
    %14 = vector.load %arg5[%c0_14, %c0_15] : memref<16x128xf32, #tpu.memory_space<vmem>>, vector<16x128xf32>
    tpu.vector_store %arg5[%c0_14, %c0_15], %13 {strides = array<i32>} : memref<16x128xf32, #tpu.memory_space<vmem>>, vector<16x128xf32>,
    return
  }
  func.func @transform_0(%arg0: i32) -> (i32, i32) {
    %c0_i32 = arith.constant 0 : i32
    %c0_i32_0 = arith.constant 0 : i32
    return %arg0, %c0_i32 : i32, i32
  }
  func.func @transform_1(%arg0: i32) -> (i32, i32) {
    %c0_i32 = arith.constant 0 : i32
    %c0_i32_0 = arith.constant 0 : i32
    return %arg0, %c0_i32 : i32, i32
  }
  func.func @transform_2(%arg0: i32) -> (i32, i32) {
    %c0_i32 = arith.constant 0 : i32
    %c0_i32_0 = arith.constant 0 : i32
    return %arg0, %c0_i32 : i32, i32
  }
  func.func @transform_3(%arg0: i32) -> (i32, i32, i32) {
    %c0_i32 = arith.constant 0 : i32
    %c0_i32_0 = arith.constant 0 : i32
    %c0_i32_1 = arith.constant 0 : i32
    %c0_i32_2 = arith.constant 0 : i32
    return %c0_i32, %c0_i32_0, %c0_i32_1 : i32, i32, i32
  }
  func.func @transform_4(%arg0: i32) -> (i32, i32) {
    %c0_i32 = arith.constant 0 : i32
    %c0_i32_0 = arith.constant 0 : i32
    return %arg0, %c0_i32 : i32, i32
  }
}

</mosaic_0001>

<llo_original>
// kernel: wave_unpool.1
$region0: #{wave_unpool.1}
  #allocation0 [shape = 'u32[]', space=smem, size = 0x4, offset = 0x4, fixed_abs, tag = 'smem constant byte address 0x4 - core index']
  #allocation1 [shape = 'u32[144,128]{1,0:T(1,128)}', space=vmem, size = 0x12000, scoped, tag = 'internal scratch']
  %s0 = inlined_call_operand.vmem [shape: f32[64,32], index: 0, kind: input, shape index: {}]
  %s1 = inlined_call_operand.vmem [shape: f32[64,32], index: 1, kind: input, shape index: {}]
  %s2 = inlined_call_operand.vmem [shape: f32[64,32], index: 2, kind: input, shape index: {}]
  %s3 = inlined_call_operand.vmem [shape: f32[3,32,128], index: 3, kind: input, shape index: {}]
  %s4 = inlined_call_operand.vmem [shape: f32[64,128], index: 4, kind: output, shape index: {}]
  %s5 = sld [smem:[#allocation0]]
  $region49: #{wave_unpool.1} parent=0
    _
  %s7 = ssub.s32 1, %s5
  %s8 = scalar_select 0, %s7, %s5
  loop: start=0, step=1, limit=6
  $region2: #{wave_unpool.1} parent=0 // loop_pre_header
    _
  $region3: #{wave_unpool.1} parent=0 // loop_header
    %s10 = sphi 0, %s14
    %p11 = scmp.ge.s32.totalorder %s10, 6
    %s20 = sphi 0, %s22
    %s23 = sphi 0, %s20
    %s24 = sphi 0, %s23
    %s40 = sphi 0, %s24
    %s46 = sphi 0, %s48
    %s49 = sphi 0, %s46
    %s50 = sphi 0, %s49
    %s66 = sphi 0, %s50
    %s72 = sphi 0, %s74
    %s75 = sphi 0, %s72
    %s76 = sphi 0, %s75
    %s92 = sphi 0, %s76
    %s96 = sphi 0, %s96
    %s98 = sphi 0, %s96
    %s99 = sphi 0, %s98
    %s113 = sphi 0, %s99
    %s119 = sphi 0, %s121
    %s122 = sphi 0, %s119
    %s123 = sphi 0, %s122
    %s139 = sphi 0, %s123
  $region4: #{wave_unpool.1} parent=0 // loop_header_branch
    %13 = sbr.rel (%p11) target = $region8
  $region5: #{wave_unpool.1} parent=0 // loop_body
    %s15 = ssub.s32 %s10, 1
    %s16 = ssub.s32 %s10, 2
    %s17 = sadd.s32 %s10, 1
    %s18 = ssub.s32 %s10, %s17
    %p19 = scmp.eq.s32.totalorder %s18, 0
    %s21 = sadd.s32 %s20, 1
    %s22 = scalar_select %p19, %s20, %s21
    %p25 = pneg %p19
    %p26 = scmp.eq.s32.totalorder %s10, 3
    %p27 = por %p25, %p26
    %p28 = scmp.ne.s32.totalorder %s20, %s23
    %p29 = scmp.eq.s32.totalorder %s10, 0
    %p30 = por %p28, %p29
    %p31 = scmp.ne.s32.totalorder %s20, %s23
    %p32 = scmp.eq.s32.totalorder %s15, 3
    %p33 = por %p31, %p32
    %p34 = scmp.ne.s32.totalorder %s23, %s24
    %p35 = scmp.eq.s32.totalorder %s15, 0
    %p36 = por %p34, %p35
    %p37 = scmp.ne.s32.totalorder %s23, %s24
    %p38 = scmp.eq.s32.totalorder %s16, 3
    %p39 = por %p37, %p38
    %p41 = scmp.ne.s32.totalorder %s24, %s40
    %p42 = scmp.eq.s32.totalorder %s16, 0
    %p43 = por %p41, %p42
    %s44 = ssub.s32 %s10, %s17
    %p45 = scmp.eq.s32.totalorder %s44, 0
    %s47 = sadd.s32 %s46, 1
    %s48 = scalar_select %p45, %s46, %s47
    %p51 = pneg %p45
    %p52 = scmp.eq.s32.totalorder %s10, 3
    %p53 = por %p51, %p52
    %p54 = scmp.ne.s32.totalorder %s46, %s49
    %p55 = scmp.eq.s32.totalorder %s10, 0
    %p56 = por %p54, %p55
    %p57 = scmp.ne.s32.totalorder %s46, %s49
    %p58 = scmp.eq.s32.totalorder %s15, 3
    %p59 = por %p57, %p58
    %p60 = scmp.ne.s32.totalorder %s49, %s50
    %p61 = scmp.eq.s32.totalorder %s15, 0
    %p62 = por %p60, %p61
    %p63 = scmp.ne.s32.totalorder %s49, %s50
    %p64 = scmp.eq.s32.totalorder %s16, 3
    %p65 = por %p63, %p64
    %p67 = scmp.ne.s32.totalorder %s50, %s66
    %p68 = scmp.eq.s32.totalorder %s16, 0
    %p69 = por %p67, %p68
    %s70 = ssub.s32 %s10, %s17
    %p71 = scmp.eq.s32.totalorder %s70, 0
    %s73 = sadd.s32 %s72, 1
    %s74 = scalar_select %p71, %s72, %s73
    %p77 = pneg %p71
    %p78 = scmp.eq.s32.totalorder %s10, 3
    %p79 = por %p77, %p78
    %p80 = scmp.ne.s32.totalorder %s72, %s75
    %p81 = scmp.eq.s32.totalorder %s10, 0
    %p82 = por %p80, %p81
    %p83 = scmp.ne.s32.totalorder %s72, %s75
    %p84 = scmp.eq.s32.totalorder %s15, 3
    %p85 = por %p83, %p84
    %p86 = scmp.ne.s32.totalorder %s75, %s76
    %p87 = scmp.eq.s32.totalorder %s15, 0
    %p88 = por %p86, %p87
    %p89 = scmp.ne.s32.totalorder %s75, %s76
    %p90 = scmp.eq.s32.totalorder %s16, 3
    %p91 = por %p89, %p90
    %p93 = scmp.ne.s32.totalorder %s76, %s92
    %p94 = scmp.eq.s32.totalorder %s16, 0
    %p95 = por %p93, %p94
    %s97 = sadd.s32 %s96, 1
    %p100 = scmp.eq.s32.totalorder %s10, 3
    %p101 = scmp.ne.s32.totalorder %s96, %s98
    %p102 = scmp.eq.s32.totalorder %s10, 0
    %p103 = por %p101, %p102
    %p104 = scmp.ne.s32.totalorder %s96, %s98
    %p105 = scmp.eq.s32.totalorder %s15, 3
    %p106 = por %p104, %p105
    %p107 = scmp.ne.s32.totalorder %s98, %s99
    %p108 = scmp.eq.s32.totalorder %s15, 0
    %p109 = por %p107, %p108
    %p110 = scmp.ne.s32.totalorder %s98, %s99
    %p111 = scmp.eq.s32.totalorder %s16, 3
    %p112 = por %p110, %p111
    %p114 = scmp.ne.s32.totalorder %s99, %s113
    %p115 = scmp.eq.s32.totalorder %s16, 0
    %p116 = por %p114, %p115
    %s117 = ssub.s32 %s10, %s17
    %p118 = scmp.eq.s32.totalorder %s117, 0
    %s120 = sadd.s32 %s119, 1
    %s121 = scalar_select %p118, %s119, %s120
    %p124 = pneg %p118
    %p125 = scmp.eq.s32.totalorder %s10, 3
    %p126 = por %p124, %p125
    %p127 = scmp.ne.s32.totalorder %s119, %s122
    %p128 = scmp.eq.s32.totalorder %s10, 0
    %p129 = por %p127, %p128
    %p130 = scmp.ne.s32.totalorder %s119, %s122
    %p131 = scmp.eq.s32.totalorder %s15, 3
    %p132 = por %p130, %p131
    %p133 = scmp.ne.s32.totalorder %s122, %s123
    %p134 = scmp.eq.s32.totalorder %s15, 0
    %p135 = por %p133, %p134
    %p136 = scmp.ne.s32.totalorder %s122, %s123
    %p137 = scmp.eq.s32.totalorder %s16, 3
    %p138 = por %p136, %p137
    %p140 = scmp.ne.s32.totalorder %s123, %s139
    %p141 = scmp.eq.s32.totalorder %s16, 0
    %p142 = por %p140, %p141
    %p143 = scmp.le.s32.totalorder 1, %s10
    %p144 = scmp.lt.s32.totalorder %s10, 5
    %p145 = pnand %p143, %p144
    %p146 = pneg %p145
    // Predicated region
    $region9: #{wave_unpool.1} parent=5 // pred_check
      _
    $region10: #{wave_unpool.1} parent=5 // pred_check_branch
      %148 = sbr.rel (%p145) target = $region12
    $region11: #{wave_unpool.1} parent=5 // pred_region
      %s149 = ssub.s32 %s10, 1
      // Predicated region
      $region13: #{wave_unpool.1} parent=11 // pred_check
        %p150 = pneg %p109
      $region14: #{wave_unpool.1} parent=11 // pred_check_branch
        %152 = sbr.rel (%p150) target = $region16
      $region15: #{wave_unpool.1} parent=11 // pred_region
        _
      $region16: #{wave_unpool.1} parent=11 // pred_fallthru
        _
    $region12: #{wave_unpool.1} parent=5 // pred_fallthru
      _
    %p153 = scmp.lt.s32.totalorder %s10, 4
    // Predicated region
    $region17: #{wave_unpool.1} parent=5 // pred_check
      %p154 = pneg %p153
    $region18: #{wave_unpool.1} parent=5 // pred_check_branch
      %156 = sbr.rel (%p154) target = $region20
    $region19: #{wave_unpool.1} parent=5 // pred_region
      // Predicated region
      $region21: #{wave_unpool.1} parent=19 // pred_check
        %p157 = pneg %p30
      $region22: #{wave_unpool.1} parent=19 // pred_check_branch
        %159 = sbr.rel (%p157) target = $region24
      $region23: #{wave_unpool.1} parent=19 // pred_region
        %s160 = smul.u32 2, %s10
        %p161 = scmp.lt.s32.totalorder %s160, 7
        %s162 = scalar_select %p161, %s160, 7
        %s163 = smul.addr %s162, 8
        %s164 = scalar_lea.vmem %s0, %s163
        %s165 = smul.u32 2, %s10
      $region24: #{wave_unpool.1} parent=19 // pred_fallthru
        _
      // Predicated region
      $region25: #{wave_unpool.1} parent=19 // pred_check
        %p166 = pneg %p56
      $region26: #{wave_unpool.1} parent=19 // pred_check_branch
        %168 = sbr.rel (%p166) target = $region28
      $region27: #{wave_unpool.1} parent=19 // pred_region
        %s169 = smul.u32 2, %s10
        %p170 = scmp.lt.s32.totalorder %s169, 7
        %s171 = scalar_select %p170, %s169, 7
        %s172 = smul.addr %s171, 8
        %s173 = scalar_lea.vmem %s1, %s172
        %s174 = smul.u32 2, %s10
      $region28: #{wave_unpool.1} parent=19 // pred_fallthru
        _
      // Predicated region
      $region29: #{wave_unpool.1} parent=19 // pred_check
        %p175 = pneg %p82
      $region30: #{wave_unpool.1} parent=19 // pred_check_branch
        %177 = sbr.rel (%p175) target = $region32
      $region31: #{wave_unpool.1} parent=19 // pred_region
        %s178 = smul.u32 2, %s10
        %p179 = scmp.lt.s32.totalorder %s178, 7
        %s180 = scalar_select %p179, %s178, 7
        %s181 = smul.addr %s180, 8
        %s182 = scalar_lea.vmem %s2, %s181
        %s183 = smul.u32 2, %s10
      $region32: #{wave_unpool.1} parent=19 // pred_fallthru
        _
    $region20: #{wave_unpool.1} parent=5 // pred_fallthru
      _
    %p184 = scmp.le.s32.totalorder 1, %s10
    %p185 = scmp.lt.s32.totalorder %s10, 5
    %p186 = pnand %p184, %p185
    %p187 = pneg %p186
    // Predicated region
    $region33: #{wave_unpool.1} parent=5 // pred_check
      _
    $region34: #{wave_unpool.1} parent=5 // pred_check_branch
      %189 = sbr.rel (%p186) target = $region36
    $region35: #{wave_unpool.1} parent=5 // pred_region
      %s190 = ssub.s32 %s10, 1
      %s191 = smul.u32 2, %s15
      %p192 = scmp.lt.s32.totalorder %s191, 7
      %s193 = scalar_select %p192, %s191, 7
      %s194 = smul.addr %s193, 8
      %s195 = scalar_lea.vmem %s0, %s194
      %p196 = pneg %p36
      %p197 = pneg %p33
      %s198 = smul.u32 2, %s15
      %p199 = scmp.lt.s32.totalorder %s198, 7
      %s200 = scalar_select %p199, %s198, 7
      %s201 = smul.addr %s200, 8
      %s202 = scalar_lea.vmem %s1, %s201
      %p203 = pneg %p62
      %p204 = pneg %p59
      %s205 = smul.u32 2, %s15
      %p206 = scmp.lt.s32.totalorder %s205, 7
      %s207 = scalar_select %p206, %s205, 7
      %s208 = smul.addr %s207, 8
      %s209 = scalar_lea.vmem %s2, %s208
      %p210 = pneg %p88
      %p211 = pneg %p85
      %p212 = pneg %p109
      %p213 = pneg %p106
      %p214 = pneg %p135
      %p215 = pneg %p132
      %s216 = smul.u32 2, %s15
      %p217 = scmp.lt.s32.totalorder %s216, 7
      %s218 = scalar_select %p217, %s216, 7
      %s219 = smul.addr %s218, 8
      %s220 = scalar_lea.vmem %s4, %s219
      %s221 = smul.u32 2, %s15
      %p222 = scmp.lt.s32.totalorder %s221, 7
      %s223 = scalar_select %p222, %s221, 7
      %s224 = smul.addr %s223, 8
      %s225 = scalar_lea.vmem %s0, %s224
      %s226 = smul.u32 2, %s15
      %s227 = smul.u32 2, %s15
      %p228 = scmp.lt.s32.totalorder %s227, 7
      %s229 = scalar_select %p228, %s227, 7
      %s230 = smul.addr %s229, 8
      %s231 = scalar_lea.vmem %s1, %s230
      %s232 = smul.u32 2, %s15
      %s233 = smul.u32 2, %s15
      %p234 = scmp.lt.s32.totalorder %s233, 7
      %s235 = scalar_select %p234, %s233, 7
      %s236 = smul.addr %s235, 8
      %s237 = scalar_lea.vmem %s2, %s236
      %s238 = smul.u32 2, %s15
      %s239 = smul.u32 2, %s15
      %p240 = scmp.lt.s32.totalorder %s239, 7
      %s241 = scalar_select %p240, %s239, 7
      %s242 = smul.addr %s241, 8
      %s243 = scalar_lea.vmem %s4, %s242
      %s244 = smul.u32 2, %s15
      %v245 = vld [vmem:[%s225] sm:$0xff]
      %v246 = vld [vmem:[%s225 + $0x8] sm:$0xff]
      %v247 = vld [vmem:[%s3] sm:$0xff]
      %v248 = vld [vmem:[%s3 + $0x8] sm:$0xff]
      %v249 = vld [vmem:[%s3 + $0x10] sm:$0xff]
      %v250 = vld [vmem:[%s3 + $0x18] sm:$0xff]
      %v251 = vld [vmem:[%s231] sm:$0xff]
      %v252 = vld [vmem:[%s231 + $0x8] sm:$0xff]
      %s253 = scalar_lea.vmem %s3, 32
      %v254 = vld [vmem:[%s253] sm:$0xff]
      %v255 = vld [vmem:[%s253 + $0x8] sm:$0xff]
      %v256 = vld [vmem:[%s253 + $0x10] sm:$0xff]
      %v257 = vld [vmem:[%s253 + $0x18] sm:$0xff]
      %vm258 = vcmask 261120
      %v260 = vsel %vm258, %v251, 0
      %v263 = vsel %vm258, %v252, 0
      %265 = vmatprep.subr.mxu0 0.0
      %266 = vmatpush1.msra.mxu0 0.0
      %267 = vmatprep.subr.mxu0 0.0
      %268 = vmatpush1.msra.mxu0 0.0
      %269 = vmatprep.subr.mxu0 0.0
      %270 = vmatpush1.msra.mxu0 0.0
      %271 = vmatprep.subr.mxu0 0.0
      %272 = vmatpush1.msra.mxu0 0.0
      %273 = vmatprep.subr.mxu0 0.0
      %274 = vmatpush1.msra.mxu0 0.0
      %275 = vmatprep.subr.mxu0 0.0
      %276 = vmatpush1.msra.mxu0 0.0
      %277 = vmatprep.subr.mxu0 0.0
      %278 = vmatpush1.msra.mxu0 0.0
      %279 = vmatprep.subr.mxu0 0.0
      %280 = vmatpush1.msra.mxu0 0.0
      %281 = vmatprep.subr.mxu0 0.0
      %282 = vmatpush1.msra.mxu0 0.0
      %283 = vmatprep.subr.mxu0 0.0
      %284 = vmatpush1.msra.mxu0 0.0
      %285 = vmatprep.subr.mxu0 0.0
      %286 = vmatpush1.msra.mxu0 0.0
      %287 = vmatprep.subr.mxu0 0.0
      %288 = vmatpush1.msra.mxu0 0.0
      %289 = vmatprep.subr.mxu0 0.0
      %290 = vmatpush1.msra.mxu0 %v257
      %291 = vmatprep.subr.mxu0 0.0
      %292 = vmatpush1.msra.mxu0 %v256
      %293 = vmatprep.subr.mxu0 0.0
      %294 = vmatpush1.msra.mxu0 %v255
      %295 = vmatprep.subr.mxu0 0.0
      %296 = vmatpush1.msra.mxu0 %v254
      %297 = vmatprep.subr.mxu0 0.0
      %298 = vmatpush2.msra.mxu0 0.0
      %299 = vmatprep.subr.mxu0 0.0
      %300 = vmatpush2.msra.mxu0 0.0
      %301 = vmatprep.subr.mxu0 0.0
      %302 = vmatpush2.msra.mxu0 0.0
      %303 = vmatprep.subr.mxu0 0.0
      %304 = vmatpush2.msra.mxu0 0.0
      %305 = vmatprep.subr.mxu0 0.0
      %306 = vmatpush2.msra.mxu0 0.0
      %307 = vmatprep.subr.mxu0 0.0
      %308 = vmatpush2.msra.mxu0 0.0
      %309 = vmatprep.subr.mxu0 0.0
      %310 = vmatpush2.msra.mxu0 0.0
      %311 = vmatprep.subr.mxu0 0.0
      %312 = vmatpush2.msra.mxu0 0.0
      %313 = vmatprep.subr.mxu0 0.0
      %314 = vmatpush2.msra.mxu0 0.0
      %315 = vmatprep.subr.mxu0 0.0
      %316 = vmatpush2.msra.mxu0 0.0
      %317 = vmatprep.subr.mxu0 0.0
      %318 = vmatpush2.msra.mxu0 0.0
      %319 = vmatprep.subr.mxu0 0.0
      %320 = vmatpush2.msra.mxu0 0.0
      %321 = vmatprep.subr.mxu0 0.0
      %322 = vmatpush2.msra.mxu0 0.0
      %323 = vmatprep.subr.mxu0 0.0
      %324 = vmatpush2.msra.mxu0 0.0
      %325 = vmatprep.subr.mxu0 0.0
      %326 = vmatpush2.msra.mxu0 0.0
      %327 = vmatprep.subr.mxu0 0.0
      %328 = vmatpush2.msra.mxu0 0.0
      %329 = vmatprep.mubr.f32.mxu0 0.0
      %330 = vmatmul.mubr.f32.gmra.mxu0 %v260
      %v331 = vpop.f32.mrf.mxu0
      %v332 = vadd.f32 0.0, %v331
      %v333 = vpop.f32.mrf.mxu0
      %334 = vmatprep.mubr.f32.mxu0 0.0
      %335 = vmatmul.mubr.f32.gmra.mxu0 %v263
      %v336 = vpop.f32.mrf.mxu0
      %v337 = vadd.f32 0.0, %v336
      %v338 = vpop.f32.mrf.mxu0
      %339 = vdwg.mxu0
      %v341 = vsel %vm258, %v245, 0
      %v344 = vsel %vm258, %v246, 0
      %346 = vmatprep.subr.mxu0 0.0
      %347 = vmatpush1.msra.mxu0 0.0
      %348 = vmatprep.subr.mxu0 0.0
      %349 = vmatpush1.msra.mxu0 0.0
      %350 = vmatprep.subr.mxu0 0.0
      %351 = vmatpush1.msra.mxu0 0.0
      %352 = vmatprep.subr.mxu0 0.0
      %353 = vmatpush1.msra.mxu0 0.0
      %354 = vmatprep.subr.mxu0 0.0
      %355 = vmatpush1.msra.mxu0 0.0
      %356 = vmatprep.subr.mxu0 0.0
      %357 = vmatpush1.msra.mxu0 0.0
      %358 = vmatprep.subr.mxu0 0.0
      %359 = vmatpush1.msra.mxu0 0.0
      %360 = vmatprep.subr.mxu0 0.0
      %361 = vmatpush1.msra.mxu0 0.0
      %362 = vmatprep.subr.mxu0 0.0
      %363 = vmatpush1.msra.mxu0 0.0
      %364 = vmatprep.subr.mxu0 0.0
      %365 = vmatpush1.msra.mxu0 0.0
      %366 = vmatprep.subr.mxu0 0.0
      %367 = vmatpush1.msra.mxu0 0.0
      %368 = vmatprep.subr.mxu0 0.0
      %369 = vmatpush1.msra.mxu0 0.0
      %370 = vmatprep.subr.mxu0 0.0
      %371 = vmatpush1.msra.mxu0 %v250
      %372 = vmatprep.subr.mxu0 0.0
      %373 = vmatpush1.msra.mxu0 %v249
      %374 = vmatprep.subr.mxu0 0.0
      %375 = vmatpush1.msra.mxu0 %v248
      %376 = vmatprep.subr.mxu0 0.0
      %377 = vmatpush1.msra.mxu0 %v247
      %378 = vmatprep.subr.mxu0 0.0
      %379 = vmatpush2.msra.mxu0 0.0
      %380 = vmatprep.subr.mxu0 0.0
      %381 = vmatpush2.msra.mxu0 0.0
      %382 = vmatprep.subr.mxu0 0.0
      %383 = vmatpush2.msra.mxu0 0.0
      %384 = vmatprep.subr.mxu0 0.0
      %385 = vmatpush2.msra.mxu0 0.0
      %386 = vmatprep.subr.mxu0 0.0
      %387 = vmatpush2.msra.mxu0 0.0
      %388 = vmatprep.subr.mxu0 0.0
      %389 = vmatpush2.msra.mxu0 0.0
      %390 = vmatprep.subr.mxu0 0.0
      %391 = vmatpush2.msra.mxu0 0.0
      %392 = vmatprep.subr.mxu0 0.0
      %393 = vmatpush2.msra.mxu0 0.0
      %394 = vmatprep.subr.mxu0 0.0
      %395 = vmatpush2.msra.mxu0 0.0
      %396 = vmatprep.subr.mxu0 0.0
      %397 = vmatpush2.msra.mxu0 0.0
      %398 = vmatprep.subr.mxu0 0.0
      %399 = vmatpush2.msra.mxu0 0.0
      %400 = vmatprep.subr.mxu0 0.0
      %401 = vmatpush2.msra.mxu0 0.0
      %402 = vmatprep.subr.mxu0 0.0
      %403 = vmatpush2.msra.mxu0 0.0
      %404 = vmatprep.subr.mxu0 0.0
      %405 = vmatpush2.msra.mxu0 0.0
      %406 = vmatprep.subr.mxu0 0.0
      %407 = vmatpush2.msra.mxu0 0.0
      %408 = vmatprep.subr.mxu0 0.0
      %409 = vmatpush2.msra.mxu0 0.0
      %410 = vmatprep.mubr.f32.mxu0 0.0
      %411 = vmatmul.mubr.f32.gmra.mxu0 %v341
      %v412 = vpop.f32.mrf.mxu0
      %v413 = vadd.f32 %v332, %v412
      %v414 = vpop.f32.mrf.mxu0
      %415 = vmatprep.mubr.f32.mxu0 0.0
      %416 = vmatmul.mubr.f32.gmra.mxu0 %v344
      %v417 = vpop.f32.mrf.mxu0
      %v418 = vadd.f32 %v337, %v417
      %v419 = vpop.f32.mrf.mxu0
      %420 = vdwg.mxu0
      %v421 = vld [vmem:[%s237] sm:$0xff]
      %v422 = vld [vmem:[%s237 + $0x8] sm:$0xff]
      %s423 = scalar_lea.vmem %s3, 64
      %v424 = vld [vmem:[%s423] sm:$0xff]
      %v425 = vld [vmem:[%s423 + $0x8] sm:$0xff]
      %v426 = vld [vmem:[%s423 + $0x10] sm:$0xff]
      %v427 = vld [vmem:[%s423 + $0x18] sm:$0xff]
      %v429 = vsel %vm258, %v421, 0
      %v432 = vsel %vm258, %v422, 0
      %434 = vmatprep.subr.mxu0 0.0
      %435 = vmatpush1.msra.mxu0 0.0
      %436 = vmatprep.subr.mxu0 0.0
      %437 = vmatpush1.msra.mxu0 0.0
      %438 = vmatprep.subr.mxu0 0.0
      %439 = vmatpush1.msra.mxu0 0.0
      %440 = vmatprep.subr.mxu0 0.0
      %441 = vmatpush1.msra.mxu0 0.0
      %442 = vmatprep.subr.mxu0 0.0
      %443 = vmatpush1.msra.mxu0 0.0
      %444 = vmatprep.subr.mxu0 0.0
      %445 = vmatpush1.msra.mxu0 0.0
      %446 = vmatprep.subr.mxu0 0.0
      %447 = vmatpush1.msra.mxu0 0.0
      %448 = vmatprep.subr.mxu0 0.0
      %449 = vmatpush1.msra.mxu0 0.0
      %450 = vmatprep.subr.mxu0 0.0
      %451 = vmatpush1.msra.mxu0 0.0
      %452 = vmatprep.subr.mxu0 0.0
      %453 = vmatpush1.msra.mxu0 0.0
      %454 = vmatprep.subr.mxu0 0.0
      %455 = vmatpush1.msra.mxu0 0.0
      %456 = vmatprep.subr.mxu0 0.0
      %457 = vmatpush1.msra.mxu0 0.0
      %458 = vmatprep.subr.mxu0 0.0
      %459 = vmatpush1.msra.mxu0 %v427
      %460 = vmatprep.subr.mxu0 0.0
      %461 = vmatpush1.msra.mxu0 %v426
      %462 = vmatprep.subr.mxu0 0.0
      %463 = vmatpush1.msra.mxu0 %v425
      %464 = vmatprep.subr.mxu0 0.0
      %465 = vmatpush1.msra.mxu0 %v424
      %466 = vmatprep.subr.mxu0 0.0
      %467 = vmatpush2.msra.mxu0 0.0
      %468 = vmatprep.subr.mxu0 0.0
      %469 = vmatpush2.msra.mxu0 0.0
      %470 = vmatprep.subr.mxu0 0.0
      %471 = vmatpush2.msra.mxu0 0.0
      %472 = vmatprep.subr.mxu0 0.0
      %473 = vmatpush2.msra.mxu0 0.0
      %474 = vmatprep.subr.mxu0 0.0
      %475 = vmatpush2.msra.mxu0 0.0
      %476 = vmatprep.subr.mxu0 0.0
      %477 = vmatpush2.msra.mxu0 0.0
      %478 = vmatprep.subr.mxu0 0.0
      %479 = vmatpush2.msra.mxu0 0.0
      %480 = vmatprep.subr.mxu0 0.0
      %481 = vmatpush2.msra.mxu0 0.0
      %482 = vmatprep.subr.mxu0 0.0
      %483 = vmatpush2.msra.mxu0 0.0
      %484 = vmatprep.subr.mxu0 0.0
      %485 = vmatpush2.msra.mxu0 0.0
      %486 = vmatprep.subr.mxu0 0.0
      %487 = vmatpush2.msra.mxu0 0.0
      %488 = vmatprep.subr.mxu0 0.0
      %489 = vmatpush2.msra.mxu0 0.0
      %490 = vmatprep.subr.mxu0 0.0
      %491 = vmatpush2.msra.mxu0 0.0
      %492 = vmatprep.subr.mxu0 0.0
      %493 = vmatpush2.msra.mxu0 0.0
      %494 = vmatprep.subr.mxu0 0.0
      %495 = vmatpush2.msra.mxu0 0.0
      %496 = vmatprep.subr.mxu0 0.0
      %497 = vmatpush2.msra.mxu0 0.0
      %498 = vmatprep.mubr.f32.mxu0 0.0
      %499 = vmatmul.mubr.f32.gmra.mxu0 %v429
      %v500 = vpop.f32.mrf.mxu0
      %v501 = vadd.f32 0.0, %v500
      %v502 = vpop.f32.mrf.mxu0
      %503 = vmatprep.mubr.f32.mxu0 0.0
      %504 = vmatmul.mubr.f32.gmra.mxu0 %v432
      %v505 = vpop.f32.mrf.mxu0
      %v506 = vadd.f32 0.0, %v505
      %v507 = vpop.f32.mrf.mxu0
      %508 = vdwg.mxu0
      %v509 = vadd.f32 %v413, %v501
      %v510 = vadd.f32 %v418, %v506
      %511 = vst [vmem:[%s243] sm:$0xff] %v509
      %512 = vst [vmem:[%s243 + $0x8] sm:$0xff] %v510
      %s513 = smul.u32 2, %s15
      %p514 = scmp.lt.s32.totalorder %s513, 7
      %s515 = scalar_select %p514, %s513, 7
      %s516 = smul.addr %s515, 8
      %s517 = scalar_lea.vmem %s4, %s516
      // Predicated region
      $region37: #{wave_unpool.1} parent=35 // pred_check
        %p518 = pneg %p132
      $region38: #{wave_unpool.1} parent=35 // pred_check_branch
        %520 = sbr.rel (%p518) target = $region40
      $region39: #{wave_unpool.1} parent=35 // pred_region
        %s521 = smul.u32 2, %s15
      $region40: #{wave_unpool.1} parent=35 // pred_fallthru
        _
    $region36: #{wave_unpool.1} parent=5 // pred_fallthru
      _
    %p522 = scmp.le.s32.totalorder 2, %s10
    // Predicated region
    $region41: #{wave_unpool.1} parent=5 // pred_check
      %p523 = pneg %p522
    $region42: #{wave_unpool.1} parent=5 // pred_check_branch
      %525 = sbr.rel (%p523) target = $region44
    $region43: #{wave_unpool.1} parent=5 // pred_region
      %s526 = ssub.s32 %s10, 2
      // Predicated region
      $region45: #{wave_unpool.1} parent=43 // pred_check
        %p527 = pneg %p138
      $region46: #{wave_unpool.1} parent=43 // pred_check_branch
        %529 = sbr.rel (%p527) target = $region48
      $region47: #{wave_unpool.1} parent=43 // pred_region
        %s530 = smul.u32 2, %s16
        %p531 = scmp.lt.s32.totalorder %s530, 7
        %s532 = scalar_select %p531, %s530, 7
        %s533 = smul.addr %s532, 8
        %s534 = scalar_lea.vmem %s4, %s533
      $region48: #{wave_unpool.1} parent=43 // pred_fallthru
        _
    $region44: #{wave_unpool.1} parent=5 // pred_fallthru
      _
  $region6: #{wave_unpool.1} parent=0 // loop_footer
    %s14 = sadd.s32 1, %s10
  $region7: #{wave_unpool.1} parent=0 // loop_footer_branch
    %9 = sbr.rel target = $region3
  $region8: #{wave_unpool.1} parent=0 // loop_exit
    _

</llo_original>
